<compile_context>
chip_gen: v7x
topology: tpu7x:2x2x1
jax: 0.10.0
libtpu: 0.0.40
codegen_flags: <defaults>
</compile_context>

<pallas_src>
import functools

import jax
import jax.numpy as jnp
from jax import lax
from jax.experimental import pallas as pl
from jax.experimental.pallas import tpu as pltpu

THRESHOLD = 0.5
NEG_POS_RATIO = 3
ALPHA = 1.0

_LANE = 128
_SUBLANE = 8


def _round_up(x, m):
    return (x + m - 1) // m * m


def _vmem_limit_bytes():
    # 64 MiB == the whole per-TensorCore VMEM on v7x; leave headroom there,
    # fall back to a conservative 48 MiB if the query is unavailable.
    try:
        cap = int(pltpu.get_tpu_info().vmem_capacity_bytes)
        return max(32 * 1024 * 1024, min(64 * 1024 * 1024, (cap * 3) // 4))
    except Exception:  # pragma: no cover - query not available
        return 48 * 1024 * 1024


def _match_kernel(tgt_ref, gmat_ref, priors_ref, locs_ref, out_ref,
                  *, threshold, m_chunk, n_chunks):
    """Per-image prior matching + gcxgcy encode + per-prior L1.

    tgt_ref  : (1, NC, Mc, 8) f32  rows = [x1,y1,x2,y2,label,valid,0,0]
    gmat_ref : (1, NC, 8, Mc) f32  same data, channel-major (MXU gather operand)
    priors_ref: (8, P) f32         rows = [px1,py1,px2,py2,pcx,pcy,1/pw,1/ph]
    locs_ref : (1, 4, P) native dtype (e.g. bf16) predicted offsets, channel-major
    out_ref  : (1, 2, P) f32       rows = [matched label, masked per-prior L1 sum]
    """
    pri = priors_ref[...]                                   # (8, P)
    P = pri.shape[1]

    px1 = pri[0:1]; py1 = pri[1:2]; px2 = pri[2:3]; py2 = pri[3:4]
    pcx = pri[4:5]; pcy = pri[5:6]; inv_pw = pri[6:7]; inv_ph = pri[7:8]
    area_p = (px2 - px1) * (py2 - py1)                      # (1, P)

    # broadcast-shaped iotas (no persistent (M,P) i32 buffers)
    pri_iota = lax.broadcasted_iota(jnp.int32, (1, P), 1)       # (1, P)
    obj_iota = lax.broadcasted_iota(jnp.int32, (m_chunk, 1), 0)  # (Mc, 1)

    # running accumulators across object chunks
    best = jnp.full((1, P), -jnp.inf, jnp.float32)          # boosted-IoU of winner
    gathered = jnp.zeros((8, P), jnp.float32)               # winner's packed row

    # Statically unrolled chunk loop (n_chunks is small; carries serialize chunks
    # so only one set of (Mc,P) temporaries is live at a time).
    for c in range(n_chunks):
        tgt_c = tgt_ref[0, c]                               # (Mc, 8)
        gmat_c = gmat_ref[0, c]                             # (8, Mc)

        bx1 = tgt_c[:, 0:1]; by1 = tgt_c[:, 1:2]
        bx2 = tgt_c[:, 2:3]; by2 = tgt_c[:, 3:4]            # (Mc, 1)
        valid = tgt_c[:, 5:6]                               # (Mc, 1)

        # IoU(gt chunk, priors): (Mc, P).  Approximate reciprocal (EUP slot) is
        # used for RANKING only -- the threshold test is redone exactly below.
        iw = jnp.maximum(jnp.minimum(bx2, px2) - jnp.maximum(bx1, px1), 0.0)
        ih = jnp.maximum(jnp.minimum(by2, py2) - jnp.maximum(by1, py1), 0.0)
        inter = iw * ih
        area_b = (bx2 - bx1) * (by2 - by1)                  # (Mc, 1)
        union = area_b + area_p - inter                     # > 0 (priors have area)
        iou = inter * pl.reciprocal(union, approx=True)
        iou = jnp.where(valid > 0.0, iou, -1.0)             # padded objects lose

        # best prior per object (min prior index on exact ties)
        best_per_obj = jnp.max(iou, axis=1, keepdims=True)                  # (Mc,1)
        prior_for_obj = jnp.min(jnp.where(iou == best_per_obj, pri_iota, P),
                                axis=1, keepdims=True)                      # (Mc,1)

        # Fused forced assignment: boost each object's best prior to 2+global_idx
        # so that one max over objects gives both obj_for_prior and the forced
        # "overlap = 1.0" semantics; the +idx keeps PyTorch's last-write-wins.
        forced = (prior_for_obj == pri_iota) & (valid > 0.0)                # (Mc,P)
        gidx_f = (c * m_chunk + obj_iota).astype(jnp.float32)               # (Mc,1)
        iou_b = jnp.where(forced, 2.0 + gidx_f, iou)

        chunk_best = jnp.max(iou_b, axis=0, keepdims=True)                  # (1,P)
        obj_sel = jnp.min(jnp.where(iou_b == chunk_best, obj_iota, m_chunk),
                          axis=0, keepdims=True)                            # (1,P)
        onehot = (obj_sel == obj_iota).astype(jnp.float32)                  # (Mc,P)

        # One small MXU matmul gathers [x1,y1,x2,y2,label,...] for every prior.
        # (Default matmul precision; set precision=HIGHEST if exact coordinate
        #  parity with the reference encoder is required.)
        chunk_gath = jnp.dot(gmat_c, onehot,
                             preferred_element_type=jnp.float32)            # (8,P)

        # merge with running winner; strict '>' keeps the earlier (lower-index)
        # chunk on exact ties, matching the unchunked min-index tie break.
        take = chunk_best > best                                            # (1,P)
        best = jnp.where(take, chunk_best, best)
        gathered = jnp.where(take, chunk_gath, gathered)

    tx1 = gathered[0:1]; ty1 = gathered[1:2]
    tx2 = gathered[2:3]; ty2 = gathered[3:4]
    label_f = gathered[4:5]

    # Exact, division-free threshold test on the matched pair (forced => 1.0).
    iw2 = jnp.maximum(jnp.minimum(tx2, px2) - jnp.maximum(tx1, px1), 0.0)
    ih2 = jnp.maximum(jnp.minimum(ty2, py2) - jnp.maximum(ty1, py1), 0.0)
    inter2 = iw2 * ih2
    union2 = (tx2 - tx1) * (ty2 - ty1) + area_p - inter2
    meets = (best >= 2.0) | (inter2 >= threshold * union2)
    label_row = jnp.where(meets, label_f, 0.0)              # (1, P)
    positive = label_row != 0.0

    # SSD gcxgcy encoding + per-prior L1 sum over the 4 coords.
    gcx = ((tx1 + tx2) * 0.5 - pcx) * (10.0 * inv_pw)
    gcy = ((ty1 + ty2) * 0.5 - pcy) * (10.0 * inv_ph)
    gw = jnp.log((tx2 - tx1) * inv_pw) * 5.0
    gh = jnp.log((ty2 - ty1) * inv_ph) * 5.0

    pred = locs_ref[0].astype(jnp.float32)                  # block stays bf16 in VMEM
    loc_abs = (jnp.abs(pred[0:1] - gcx) + jnp.abs(pred[1:2] - gcy)
               + jnp.abs(pred[2:3] - gw) + jnp.abs(pred[3:4] - gh))
    # mask negatives here: keeps inf/NaN from unmatched encodings out of the sum,
    # while positives matched to degenerate gt boxes still propagate inf/NaN so
    # the wrapper's loc_loss guard fires exactly like the reference.
    loc_abs = jnp.where(positive, loc_abs, 0.0)

    # direct, lane-dense row writes (no concatenate / zero-padding rows)
    out_ref[0, 0:1] = label_row
    out_ref[0, 1:2] = loc_abs


def multibox_loss(pred_locs, pred_logits, boxes, labels, valid, priors_cxcy,
                  *, threshold=THRESHOLD, neg_pos_ratio=NEG_POS_RATIO, alpha=ALPHA,
                  max_hard_negatives=None, obj_chunk=32):
    """pred_locs: (B, P, 4), pred_logits: (B, P, C) -- PyTorch conventions, any float dtype.
    boxes: (B, M, 4) padded xy gt boxes, labels: (B, M) int, valid: (B, M) {0,1}.

    max_hard_negatives: optional STATIC bound on neg_pos_ratio * max(n_positives);
    if set, hard-negative mining uses lax.top_k(k=bound) instead of a full
    O(P log P) sort.  NOTE: n_positives counts PRIORS (bounded by P, not by the
    number of gt objects M), so a 3*M bound is NOT generally safe -- choose the
    bound from the expected maximum number of positive priors, or leave None for
    the exact full-sort path.
    """
    B, P0, _ = pred_locs.shape
    C = pred_logits.shape[2]
    M0 = boxes.shape[1]

    # ---- pad the prior axis to a lane multiple: fully lane-dense sweeps/stores ----
    P = _round_up(P0, _LANE)
    pad_p = P - P0

    # ---- pad & chunk the object axis (caps live (Mc,P) temporaries in VMEM) ----
    Mc = min(int(obj_chunk), _round_up(M0, _SUBLANE))
    Mc = _round_up(Mc, _SUBLANE)
    M = _round_up(M0, Mc)
    NC = M // Mc

    labels_f = jnp.where(valid > 0, labels.astype(jnp.float32), 0.0)
    targets = jnp.concatenate(
        [boxes.astype(jnp.float32), labels_f[..., None],
         valid.astype(jnp.float32)[..., None],
         jnp.zeros((B, M0, 2), jnp.float32)], axis=-1)               # (B, M0, 8)
    targets = jnp.pad(targets, ((0, 0), (0, M - M0), (0, 0)))        # pad rows: valid=0
    tgt_chunks = targets.reshape(B, NC, Mc, 8)                       # (B, NC, Mc, 8)
    gmat_chunks = jnp.transpose(tgt_chunks, (0, 1, 3, 2))            # (B, NC, 8, Mc)

    priors_xy = jnp.concatenate(
        [priors_cxcy[:, :2] - priors_cxcy[:, 2:] / 2.0,
         priors_cxcy[:, :2] + priors_cxcy[:, 2:] / 2.0], axis=1)     # (P0, 4)
    priors_packed = jnp.concatenate(
        [priors_xy, priors_cxcy[:, :2], 1.0 / priors_cxcy[:, 2:]],
        axis=1).T.astype(jnp.float32)                                # (8, P0)
    prior_valid = None
    if pad_p:
        # dummy priors far outside [0,1]^2 with unit area: zero IoU with any gt,
        # and (min-index tie break) they can never become the forced prior.
        dummy = jnp.array([-9.0, -9.0, -8.0, -8.0, -8.5, -8.5, 1.0, 1.0],
                          jnp.float32)[:, None]
        priors_packed = jnp.concatenate(
            [priors_packed, jnp.tile(dummy, (1, pad_p))], axis=1)    # (8, P)
        prior_valid = (jnp.arange(P) < P0).astype(jnp.float32)[None, :]

    # predicted locs channel-major; tiny (B*P*4 elems), kept in native dtype.
    locs_t = jnp.transpose(
        jnp.pad(pred_locs, ((0, 0), (0, pad_p), (0, 0))), (0, 2, 1))  # (B, 4, P)

    kernel = functools.partial(_match_kernel, threshold=float(threshold),
                               m_chunk=Mc, n_chunks=NC)

    cost = pl.CostEstimate(
        flops=B * (NC * Mc * P * 28 + NC * 2 * 8 * Mc * P + 60 * P),
        transcendentals=B * (NC * Mc * P + 2 * P),
        bytes_accessed=(2 * B * NC * Mc * 8 * 4 + 8 * P * 4
                        + B * 4 * P * pred_locs.dtype.itemsize + B * 2 * P * 4))

    out = pl.pallas_call(
        kernel,
        out_shape=jax.ShapeDtypeStruct((B, 2, P), jnp.float32),
        grid_spec=pltpu.PrefetchScalarGridSpec(
            num_scalar_prefetch=0,
            grid=(B,),
            in_specs=[
                pl.BlockSpec((1, NC, Mc, 8), lambda i: (i, 0, 0, 0)),  # targets, chunked
                pl.BlockSpec((1, NC, 8, Mc), lambda i: (i, 0, 0, 0)),  # channel-major chunks
                pl.BlockSpec((8, P), lambda i: (0, 0)),                # packed priors
                pl.BlockSpec((1, 4, P), lambda i: (i, 0, 0)),          # predicted locs
            ],
            out_specs=pl.BlockSpec((1, 2, P), lambda i: (i, 0, 0))),
        compiler_params=pltpu.CompilerParams(
            dimension_semantics=("parallel",),       # batch steps independent (v7x TCs)
            vmem_limit_bytes=_vmem_limit_bytes()),
        cost_estimate=cost,
    )(tgt_chunks, gmat_chunks, priors_packed, locs_t)

    label = out[:, 0, :].astype(jnp.int32)     # (B, P)   exact for C <= 256
    loc_abs = out[:, 1, :]                     # (B, P)   pre-masked to positives
    pos = (label != 0).astype(jnp.float32)

    # ---- confidence loss in the logits' NATIVE (B, P, C) layout --------------
    # A fused XLA logsumexp + one-hot gather: the big logits tensor is never
    # transposed or copied through HBM (the v1 wrapper transpose is gone).
    logits = jnp.pad(pred_logits, ((0, 0), (0, pad_p), (0, 0))).astype(jnp.float32)
    m = jnp.max(logits, axis=-1)
    lse = m + jnp.log(jnp.sum(jnp.exp(logits - m[..., None]), axis=-1))
    onehot = jnp.arange(C, dtype=jnp.int32)[None, None, :] == label[:, :, None]
    tgt_logit = jnp.sum(jnp.where(onehot, logits, 0.0), axis=-1)
    conf = lse - tgt_logit
    # conf_loss_all[isnan] = 0 ; conf_loss_all[isinf] = 0
    conf = jnp.where(jnp.isfinite(conf), conf, 0.0)
    if prior_valid is not None:
        conf = conf * prior_valid              # padded priors never enter the loss

    n_pos = jnp.sum(pos, axis=1)               # (B,)
    n_pos_total = jnp.sum(n_pos)

    # localization loss: nn.L1Loss() (mean over n_pos * 4 elements)
    loc_loss = jnp.sum(loc_abs) / (4.0 * n_pos_total)

    # hard-negative mining
    conf_pos_sum = jnp.sum(conf * pos)
    conf_neg = jnp.where(pos > 0.0, 0.0, conf)
    if max_hard_negatives is None:
        neg_sorted = -jnp.sort(-conf_neg, axis=1)      # exact reference semantics
        k = P
    else:
        k = min(P, int(max_hard_negatives))            # O(P*k), exact iff k bounds 3*n_pos
        neg_sorted, _ = lax.top_k(conf_neg, k)
    ranks = jnp.arange(k, dtype=jnp.float32)[None, :]
    hard = (ranks < (neg_pos_ratio * n_pos)[:, None]).astype(jnp.float32)
    conf_hard_sum = jnp.sum(neg_sorted * hard)
    conf_loss = (conf_hard_sum + conf_pos_sum) / n_pos_total

    total = conf_loss + alpha * loc_loss
    # mimic the torch early-return branches (inf/nan loc_loss, inf conf_loss -> 0)
    result = jnp.where(jnp.isnan(loc_loss) | jnp.isinf(loc_loss), 0.0,
                       jnp.where(jnp.isinf(conf_loss), 0.0, total))
    return result


if __name__ == "__main__":
    key = jax.random.PRNGKey(0)
    B, P_SIDE, C, M = 2, 16, 8, 8
    P = P_SIDE * P_SIDE  # 256 priors

    # priors: 16x16 grid of fixed-size (0.1 x 0.1) boxes in cxcy form
    ii, jj = jnp.meshgrid(jnp.arange(P_SIDE), jnp.arange(P_SIDE), indexing="ij")
    cx = (jj.reshape(-1).astype(jnp.float32) + 0.5) / P_SIDE
    cy = (ii.reshape(-1).astype(jnp.float32) + 0.5) / P_SIDE
    wh = jnp.full((P,), 0.1, jnp.float32)
    priors_cxcy = jnp.stack([cx, cy, wh, wh], axis=1)            # (P, 4)

    k1, k2, k3, k4, k5 = jax.random.split(key, 5)
    # model outputs in native bf16 -- DMA'd as-is, upcast inside the kernel
    pred_locs = jax.random.normal(k1, (B, P, 4), jnp.float32).astype(jnp.bfloat16)
    pred_logits = jax.random.normal(k2, (B, P, C), jnp.float32).astype(jnp.bfloat16)

    bcxcy = jax.random.uniform(k3, (B, M, 2), minval=0.25, maxval=0.75)
    bwh = jax.random.uniform(k4, (B, M, 2), minval=0.1, maxval=0.3)
    boxes = jnp.concatenate([bcxcy - bwh / 2.0, bcxcy + bwh / 2.0], axis=-1)  # (B, M, 4)
    labels = jax.random.randint(k5, (B, M), 1, C)                             # classes 1..C-1
    n_objects = jnp.array([3, 5], jnp.int32)
    valid = (jnp.arange(M)[None, :] < n_objects[:, None]).astype(jnp.float32)

    # 128 >> 3 * n_positive_priors for this demo, so the top-k path is exact here.
    loss = multibox_loss(pred_locs, pred_logits, boxes, labels, valid, priors_cxcy,
                         max_hard_negatives=128)
    jax.block_until_ready(loss)
    print("KERNEL_OK")
</pallas_src>

<mosaic_0001>
module attributes {stable_mosaic.version = 11 : i64} {
  func.func @_match_kernel(%arg0: i32, %arg1: memref<1x1x8x8xf32, #tpu.memory_space<vmem>>, %arg2: memref<1x1x8x8xf32, #tpu.memory_space<vmem>>, %arg3: memref<8x256xf32, #tpu.memory_space<vmem>>, %arg4: memref<1x4x256xbf16, #tpu.memory_space<vmem>>, %arg5: memref<1x2x256xf32, #tpu.memory_space<vmem>>) attributes {dimension_semantics = [#tpu.dimension_semantics<parallel>], iteration_bounds = array<i64: 2>, scalar_prefetch = 0 : i64, scratch_operands = 0 : i64, tpu.core_type = #tpu.core_type<tc>, window_params = [{transform_indices = @transform_0, window_bounds = array<i64: 1, 1, 8, 8>}, {transform_indices = @transform_1, window_bounds = array<i64: 1, 1, 8, 8>}, {pipeline_mode = #tpu.pipeline_mode<synchronous>, transform_indices = @transform_2, window_bounds = array<i64: 8, 256>}, {transform_indices = @transform_3, window_bounds = array<i64: 1, 4, 256>}, {transform_indices = @transform_4, window_bounds = array<i64: 1, 2, 256>}]} {
    %c0 = arith.constant 0 : index
    %c0_0 = arith.constant 0 : index
    %0 = vector.load %arg3[%c0, %c0_0] : memref<8x256xf32, #tpu.memory_space<vmem>>, vector<8x256xf32>
    %1 = vector.extract_strided_slice %0 {offsets = [0, 0], sizes = [1, 256], strides = [1, 1]} : vector<8x256xf32> to vector<1x256xf32>
    %2 = vector.extract_strided_slice %0 {offsets = [1, 0], sizes = [1, 256], strides = [1, 1]} : vector<8x256xf32> to vector<1x256xf32>
    %3 = vector.extract_strided_slice %0 {offsets = [2, 0], sizes = [1, 256], strides = [1, 1]} : vector<8x256xf32> to vector<1x256xf32>
    %4 = vector.extract_strided_slice %0 {offsets = [3, 0], sizes = [1, 256], strides = [1, 1]} : vector<8x256xf32> to vector<1x256xf32>
    %5 = vector.extract_strided_slice %0 {offsets = [4, 0], sizes = [1, 256], strides = [1, 1]} : vector<8x256xf32> to vector<1x256xf32>
    %6 = vector.extract_strided_slice %0 {offsets = [5, 0], sizes = [1, 256], strides = [1, 1]} : vector<8x256xf32> to vector<1x256xf32>
    %7 = vector.extract_strided_slice %0 {offsets = [6, 0], sizes = [1, 256], strides = [1, 1]} : vector<8x256xf32> to vector<1x256xf32>
    %8 = vector.extract_strided_slice %0 {offsets = [7, 0], sizes = [1, 256], strides = [1, 1]} : vector<8x256xf32> to vector<1x256xf32>
    %9 = arith.subf %3, %1 : vector<1x256xf32>
    %10 = arith.subf %4, %2 : vector<1x256xf32>
    %11 = arith.mulf %9, %10 : vector<1x256xf32>
    %12 = tpu.iota {dimensions = array<i32: 1>} : vector<1x256xi32>
    %13 = tpu.iota {dimensions = array<i32: 0>} : vector<8x1xi32>
    %cst = arith.constant 0xFF800000 : f32
    %14 = vector.broadcast %cst : f32 to vector<1x256xf32>
    %cst_1 = arith.constant 0.000000e+00 : f32
    %15 = vector.broadcast %cst_1 : f32 to vector<8x256xf32>
    %c0_2 = arith.constant 0 : index
    %c0_3 = arith.constant 0 : index
    %c0_4 = arith.constant 0 : index
    %c0_5 = arith.constant 0 : index
    %16 = vector.load %arg1[%c0_2, %c0_3, %c0_4, %c0_5] : memref<1x1x8x8xf32, #tpu.memory_space<vmem>>, vector<1x1x8x8xf32>
    %17 = vector.shape_cast %16 : vector<1x1x8x8xf32> to vector<8x8xf32>
    %c0_6 = arith.constant 0 : index
    %c0_7 = arith.constant 0 : index
    %c0_8 = arith.constant 0 : index
    %c0_9 = arith.constant 0 : index
    %18 = vector.load %arg2[%c0_6, %c0_7, %c0_8, %c0_9] : memref<1x1x8x8xf32, #tpu.memory_space<vmem>>, vector<1x1x8x8xf32>
    %19 = vector.shape_cast %18 : vector<1x1x8x8xf32> to vector<8x8xf32>
    %20 = vector.extract_strided_slice %17 {offsets = [0, 0], sizes = [8, 1], strides = [1, 1]} : vector<8x8xf32> to vector<8x1xf32>
    %21 = vector.extract_strided_slice %17 {offsets = [0, 1], sizes = [8, 1], strides = [1, 1]} : vector<8x8xf32> to vector<8x1xf32>
    %22 = vector.extract_strided_slice %17 {offsets = [0, 2], sizes = [8, 1], strides = [1, 1]} : vector<8x8xf32> to vector<8x1xf32>
    %23 = vector.extract_strided_slice %17 {offsets = [0, 3], sizes = [8, 1], strides = [1, 1]} : vector<8x8xf32> to vector<8x1xf32>
    %24 = vector.extract_strided_slice %17 {offsets = [0, 5], sizes = [8, 1], strides = [1, 1]} : vector<8x8xf32> to vector<8x1xf32>
    %25 = vector.broadcast %22 : vector<8x1xf32> to vector<8x256xf32>
    %26 = vector.broadcast %3 : vector<1x256xf32> to vector<8x256xf32>
    %27 = arith.minimumf %25, %26 : vector<8x256xf32>
    %28 = vector.broadcast %20 : vector<8x1xf32> to vector<8x256xf32>
    %29 = vector.broadcast %1 : vector<1x256xf32> to vector<8x256xf32>
    %30 = arith.maximumf %28, %29 : vector<8x256xf32>
    %31 = arith.subf %27, %30 : vector<8x256xf32>
    %cst_10 = arith.constant 0.000000e+00 : f32
    %32 = vector.broadcast %cst_10 : f32 to vector<8x256xf32>
    %33 = arith.maximumf %31, %32 : vector<8x256xf32>
    %34 = vector.broadcast %23 : vector<8x1xf32> to vector<8x256xf32>
    %35 = vector.broadcast %4 : vector<1x256xf32> to vector<8x256xf32>
    %36 = arith.minimumf %34, %35 : vector<8x256xf32>
    %37 = vector.broadcast %21 : vector<8x1xf32> to vector<8x256xf32>
    %38 = vector.broadcast %2 : vector<1x256xf32> to vector<8x256xf32>
    %39 = arith.maximumf %37, %38 : vector<8x256xf32>
    %40 = arith.subf %36, %39 : vector<8x256xf32>
    %cst_11 = arith.constant 0.000000e+00 : f32
    %41 = vector.broadcast %cst_11 : f32 to vector<8x256xf32>
    %42 = arith.maximumf %40, %41 : vector<8x256xf32>
    %43 = arith.mulf %33, %42 : vector<8x256xf32>
    %44 = arith.subf %22, %20 : vector<8x1xf32>
    %45 = arith.subf %23, %21 : vector<8x1xf32>
    %46 = arith.mulf %44, %45 : vector<8x1xf32>
    %47 = vector.broadcast %46 : vector<8x1xf32> to vector<8x256xf32>
    %48 = vector.broadcast %11 : vector<1x256xf32> to vector<8x256xf32>
    %49 = arith.addf %47, %48 : vector<8x256xf32>
    %50 = arith.subf %49, %43 : vector<8x256xf32>
    %51 = tpu.reciprocal %50 {approx = true} : vector<8x256xf32> -> vector<8x256xf32>
    %52 = arith.mulf %43, %51 : vector<8x256xf32>
    %cst_12 = arith.constant 0.000000e+00 : f32
    %53 = vector.broadcast %cst_12 : f32 to vector<8x1xf32>
    %54 = arith.cmpf ogt, %24, %53 : vector<8x1xf32>
    %cst_13 = arith.constant -1.000000e+00 : f32
    %55 = vector.shape_cast %54 : vector<8x1xi1> to vector<8x1xi1>
    %56 = vector.broadcast %55 : vector<8x1xi1> to vector<8x256xi1>
    %57 = vector.broadcast %cst_13 : f32 to vector<8x256xf32>
    %58 = arith.select %56, %52, %57 : vector<8x256xi1>, vector<8x256xf32>
    %cst_14 = arith.constant dense<0xFF800000> : vector<8xf32>
    %59 = vector.multi_reduction <maximumf>, %58, %cst_14 [1] : vector<8x256xf32> to vector<8xf32>
    %60 = vector.shape_cast %59 : vector<8xf32> to vector<8x1xf32>
    %61 = vector.broadcast %60 : vector<8x1xf32> to vector<8x256xf32>
    %62 = arith.cmpf oeq, %58, %61 : vector<8x256xf32>
    %c256_i32 = arith.constant 256 : i32
    %63 = vector.shape_cast %12 : vector<1x256xi32> to vector<1x256xi32>
    %64 = vector.broadcast %63 : vector<1x256xi32> to vector<8x256xi32>
    %65 = vector.broadcast %c256_i32 : i32 to vector<8x256xi32>
    %66 = arith.select %62, %64, %65 : vector<8x256xi1>, vector<8x256xi32>
    %cst_15 = arith.constant dense<2147483647> : vector<8xi32>
    %67 = vector.multi_reduction <minsi>, %66, %cst_15 [1] : vector<8x256xi32> to vector<8xi32>
    %68 = vector.shape_cast %67 : vector<8xi32> to vector<8x1xi32>
    %69 = vector.broadcast %68 : vector<8x1xi32> to vector<8x256xi32>
    %70 = vector.broadcast %12 : vector<1x256xi32> to vector<8x256xi32>
    %71 = arith.cmpi eq, %69, %70 : vector<8x256xi32>
    %cst_16 = arith.constant 0.000000e+00 : f32
    %72 = vector.broadcast %cst_16 : f32 to vector<8x1xf32>
    %73 = arith.cmpf ogt, %24, %72 : vector<8x1xf32>
    %74 = vector.broadcast %73 : vector<8x1xi1> to vector<8x256xi1>
    %75 = arith.andi %71, %74 : vector<8x256xi1>
    %c0_i32 = arith.constant 0 : i32
    %76 = vector.broadcast %c0_i32 : i32 to vector<8x1xi32>
    %77 = arith.addi %76, %13 : vector<8x1xi32>
    %78 = arith.sitofp %77 : vector<8x1xi32> to vector<8x1xf32>
    %cst_17 = arith.constant 2.000000e+00 : f32
    %79 = vector.broadcast %cst_17 : f32 to vector<8x1xf32>
    %80 = arith.addf %79, %78 : vector<8x1xf32>
    %81 = vector.shape_cast %80 : vector<8x1xf32> to vector<8x1xf32>
    %82 = vector.broadcast %81 : vector<8x1xf32> to vector<8x256xf32>
    %83 = arith.select %75, %82, %58 : vector<8x256xi1>, vector<8x256xf32>
    %cst_18 = arith.constant dense<0xFF800000> : vector<256xf32>
    %84 = vector.multi_reduction <maximumf>, %83, %cst_18 [0] : vector<8x256xf32> to vector<256xf32>
    %85 = vector.shape_cast %84 : vector<256xf32> to vector<1x256xf32>
    %86 = vector.broadcast %85 : vector<1x256xf32> to vector<8x256xf32>
    %87 = arith.cmpf oeq, %83, %86 : vector<8x256xf32>
    %c8_i32 = arith.constant 8 : i32
    %88 = vector.shape_cast %13 : vector<8x1xi32> to vector<8x1xi32>
    %89 = vector.broadcast %88 : vector<8x1xi32> to vector<8x256xi32>
    %90 = vector.broadcast %c8_i32 : i32 to vector<8x256xi32>
    %91 = arith.select %87, %89, %90 : vector<8x256xi1>, vector<8x256xi32>
    %cst_19 = arith.constant dense<2147483647> : vector<256xi32>
    %92 = vector.multi_reduction <minsi>, %91, %cst_19 [0] : vector<8x256xi32> to vector<256xi32>
    %93 = vector.shape_cast %92 : vector<256xi32> to vector<1x256xi32>
    %94 = vector.broadcast %93 : vector<1x256xi32> to vector<8x256xi32>
    %95 = vector.broadcast %13 : vector<8x1xi32> to vector<8x256xi32>
    %96 = arith.cmpi eq, %94, %95 : vector<8x256xi32>
    %97 = arith.extui %96 : vector<8x256xi1> to vector<8x256xi32>
    %98 = arith.sitofp %97 : vector<8x256xi32> to vector<8x256xf32>
    %cst_20 = arith.constant dense<0.000000e+00> : vector<8x256xf32>
    %99 = tpu.matmul %19, %98, %cst_20 {dimension_numbers = #tpu.dot_dimension_numbers<[1], [0], [0], [1], [0, 0, 1, 1], [], []>} : vector<8x8xf32>, vector<8x256xf32>, vector<8x256xf32> -> vector<8x256xf32>
    %100 = arith.cmpf ogt, %85, %14 : vector<1x256xf32>
    %101 = arith.select %100, %85, %14 : vector<1x256xi1>, vector<1x256xf32>
    %102 = vector.shape_cast %100 : vector<1x256xi1> to vector<1x256xi1>
    %103 = vector.broadcast %102 : vector<1x256xi1> to vector<8x256xi1>
    %104 = arith.select %103, %99, %15 : vector<8x256xi1>, vector<8x256xf32>
    %105 = vector.extract_strided_slice %104 {offsets = [0, 0], sizes = [1, 256], strides = [1, 1]} : vector<8x256xf32> to vector<1x256xf32>
    %106 = vector.extract_strided_slice %104 {offsets = [1, 0], sizes = [1, 256], strides = [1, 1]} : vector<8x256xf32> to vector<1x256xf32>
    %107 = vector.extract_strided_slice %104 {offsets = [2, 0], sizes = [1, 256], strides = [1, 1]} : vector<8x256xf32> to vector<1x256xf32>
    %108 = vector.extract_strided_slice %104 {offsets = [3, 0], sizes = [1, 256], strides = [1, 1]} : vector<8x256xf32> to vector<1x256xf32>
    %109 = vector.extract_strided_slice %104 {offsets = [4, 0], sizes = [1, 256], strides = [1, 1]} : vector<8x256xf32> to vector<1x256xf32>
    %110 = arith.minimumf %107, %3 : vector<1x256xf32>
    %111 = arith.maximumf %105, %1 : vector<1x256xf32>
    %112 = arith.subf %110, %111 : vector<1x256xf32>
    %cst_21 = arith.constant 0.000000e+00 : f32
    %113 = vector.broadcast %cst_21 : f32 to vector<1x256xf32>
    %114 = arith.maximumf %112, %113 : vector<1x256xf32>
    %115 = arith.minimumf %108, %4 : vector<1x256xf32>
    %116 = arith.maximumf %106, %2 : vector<1x256xf32>
    %117 = arith.subf %115, %116 : vector<1x256xf32>
    %cst_22 = arith.constant 0.000000e+00 : f32
    %118 = vector.broadcast %cst_22 : f32 to vector<1x256xf32>
    %119 = arith.maximumf %117, %118 : vector<1x256xf32>
    %120 = arith.mulf %114, %119 : vector<1x256xf32>
    %121 = arith.subf %107, %105 : vector<1x256xf32>
    %122 = arith.subf %108, %106 : vector<1x256xf32>
    %123 = arith.mulf %121, %122 : vector<1x256xf32>
    %124 = arith.addf %123, %11 : vector<1x256xf32>
    %125 = arith.subf %124, %120 : vector<1x256xf32>
    %cst_23 = arith.constant 2.000000e+00 : f32
    %126 = vector.broadcast %cst_23 : f32 to vector<1x256xf32>
    %127 = arith.cmpf oge, %101, %126 : vector<1x256xf32>
    %cst_24 = arith.constant 5.000000e-01 : f32
    %128 = vector.broadcast %cst_24 : f32 to vector<1x256xf32>
    %129 = arith.mulf %128, %125 : vector<1x256xf32>
    %130 = arith.cmpf oge, %120, %129 : vector<1x256xf32>
    %131 = arith.ori %127, %130 : vector<1x256xi1>
    %cst_25 = arith.constant 0.000000e+00 : f32
    %132 = vector.broadcast %cst_25 : f32 to vector<1x256xf32>
    %133 = arith.select %131, %109, %132 : vector<1x256xi1>, vector<1x256xf32>
    %cst_26 = arith.constant 0.000000e+00 : f32
    %134 = vector.broadcast %cst_26 : f32 to vector<1x256xf32>
    %135 = arith.cmpf one, %133, %134 : vector<1x256xf32>
    %136 = arith.addf %105, %107 : vector<1x256xf32>
    %cst_27 = arith.constant 5.000000e-01 : f32
    %137 = vector.broadcast %cst_27 : f32 to vector<1x256xf32>
    %138 = arith.mulf %136, %137 : vector<1x256xf32>
    %139 = arith.subf %138, %5 : vector<1x256xf32>
    %cst_28 = arith.constant 1.000000e+01 : f32
    %140 = vector.broadcast %cst_28 : f32 to vector<1x256xf32>
    %141 = arith.mulf %140, %7 : vector<1x256xf32>
    %142 = arith.mulf %139, %141 : vector<1x256xf32>
    %143 = arith.addf %106, %108 : vector<1x256xf32>
    %cst_29 = arith.constant 5.000000e-01 : f32
    %144 = vector.broadcast %cst_29 : f32 to vector<1x256xf32>
    %145 = arith.mulf %143, %144 : vector<1x256xf32>
    %146 = arith.subf %145, %6 : vector<1x256xf32>
    %cst_30 = arith.constant 1.000000e+01 : f32
    %147 = vector.broadcast %cst_30 : f32 to vector<1x256xf32>
    %148 = arith.mulf %147, %8 : vector<1x256xf32>
    %149 = arith.mulf %146, %148 : vector<1x256xf32>
    %150 = arith.subf %107, %105 : vector<1x256xf32>
    %151 = arith.mulf %150, %7 : vector<1x256xf32>
    %152 = math.log %151 : vector<1x256xf32>
    %cst_31 = arith.constant 5.000000e+00 : f32
    %153 = vector.broadcast %cst_31 : f32 to vector<1x256xf32>
    %154 = arith.mulf %152, %153 : vector<1x256xf32>
    %155 = arith.subf %108, %106 : vector<1x256xf32>
    %156 = arith.mulf %155, %8 : vector<1x256xf32>
    %157 = math.log %156 : vector<1x256xf32>
    %cst_32 = arith.constant 5.000000e+00 : f32
    %158 = vector.broadcast %cst_32 : f32 to vector<1x256xf32>
    %159 = arith.mulf %157, %158 : vector<1x256xf32>
    %c0_33 = arith.constant 0 : index
    %c0_34 = arith.constant 0 : index
    %c0_35 = arith.constant 0 : index
    %160 = vector.load %arg4[%c0_33, %c0_34, %c0_35] : memref<1x4x256xbf16, #tpu.memory_space<vmem>>, vector<1x4x256xbf16>
    %161 = vector.shape_cast %160 : vector<1x4x256xbf16> to vector<4x256xbf16>
    %162 = arith.extf %161 : vector<4x256xbf16> to vector<4x256xf32>
    %163 = vector.extract_strided_slice %162 {offsets = [0, 0], sizes = [1, 256], strides = [1, 1]} : vector<4x256xf32> to vector<1x256xf32>
    %164 = arith.subf %163, %142 : vector<1x256xf32>
    %165 = math.absf %164 : vector<1x256xf32>
    %166 = vector.extract_strided_slice %162 {offsets = [1, 0], sizes = [1, 256], strides = [1, 1]} : vector<4x256xf32> to vector<1x256xf32>
    %167 = arith.subf %166, %149 : vector<1x256xf32>
    %168 = math.absf %167 : vector<1x256xf32>
    %169 = arith.addf %165, %168 : vector<1x256xf32>
    %170 = vector.extract_strided_slice %162 {offsets = [2, 0], sizes = [1, 256], strides = [1, 1]} : vector<4x256xf32> to vector<1x256xf32>
    %171 = arith.subf %170, %154 : vector<1x256xf32>
    %172 = math.absf %171 : vector<1x256xf32>
    %173 = arith.addf %169, %172 : vector<1x256xf32>
    %174 = vector.extract_strided_slice %162 {offsets = [3, 0], sizes = [1, 256], strides = [1, 1]} : vector<4x256xf32> to vector<1x256xf32>
    %175 = arith.subf %174, %159 : vector<1x256xf32>
    %176 = math.absf %175 : vector<1x256xf32>
    %177 = arith.addf %173, %176 : vector<1x256xf32>
    %cst_36 = arith.constant 0.000000e+00 : f32
    %178 = vector.broadcast %cst_36 : f32 to vector<1x256xf32>
    %179 = arith.select %135, %177, %178 : vector<1x256xi1>, vector<1x256xf32>
    %c0_37 = arith.constant 0 : index
    %c0_38 = arith.constant 0 : index
    %c0_39 = arith.constant 0 : index
    %180 = vector.load %arg5[%c0_37, %c0_38, %c0_39] : memref<1x2x256xf32, #tpu.memory_space<vmem>>, vector<1x1x256xf32>
    %181 = vector.shape_cast %180 : vector<1x1x256xf32> to vector<1x256xf32>
    %182 = vector.shape_cast %133 : vector<1x256xf32> to vector<1x1x256xf32>
    tpu.vector_store %arg5[%c0_37, %c0_38, %c0_39], %182 {strides = array<i32>} : memref<1x2x256xf32, #tpu.memory_space<vmem>>, vector<1x1x256xf32>,
    %c0_40 = arith.constant 0 : index
    %c1 = arith.constant 1 : index
    %c0_41 = arith.constant 0 : index
    %183 = vector.load %arg5[%c0_40, %c1, %c0_41] : memref<1x2x256xf32, #tpu.memory_space<vmem>>, vector<1x1x256xf32>
    %184 = vector.shape_cast %183 : vector<1x1x256xf32> to vector<1x256xf32>
    %185 = vector.shape_cast %179 : vector<1x256xf32> to vector<1x1x256xf32>
    tpu.vector_store %arg5[%c0_40, %c1, %c0_41], %185 {strides = array<i32>} : memref<1x2x256xf32, #tpu.memory_space<vmem>>, vector<1x1x256xf32>,
    return
  }
  func.func @transform_0(%arg0: i32) -> (i32, i32, i32, i32) {
    %c0_i32 = arith.constant 0 : i32
    %c0_i32_0 = arith.constant 0 : i32
    %c0_i32_1 = arith.constant 0 : i32
    %c0_i32_2 = arith.constant 0 : i32
    return %arg0, %c0_i32, %c0_i32_0, %c0_i32_1 : i32, i32, i32, i32
  }
  func.func @transform_1(%arg0: i32) -> (i32, i32, i32, i32) {
    %c0_i32 = arith.constant 0 : i32
    %c0_i32_0 = arith.constant 0 : i32
    %c0_i32_1 = arith.constant 0 : i32
    %c0_i32_2 = arith.constant 0 : i32
    return %arg0, %c0_i32, %c0_i32_0, %c0_i32_1 : i32, i32, i32, i32
  }
  func.func @transform_2(%arg0: i32) -> (i32, i32) {
    %c0_i32 = arith.constant 0 : i32
    %c0_i32_0 = arith.constant 0 : i32
    %c0_i32_1 = arith.constant 0 : i32
    return %c0_i32, %c0_i32_0 : i32, i32
  }
  func.func @transform_3(%arg0: i32) -> (i32, i32, i32) {
    %c0_i32 = arith.constant 0 : i32
    %c0_i32_0 = arith.constant 0 : i32
    %c0_i32_1 = arith.constant 0 : i32
    return %arg0, %c0_i32, %c0_i32_0 : i32, i32, i32
  }
  func.func @transform_4(%arg0: i32) -> (i32, i32, i32) {
    %c0_i32 = arith.constant 0 : i32
    %c0_i32_0 = arith.constant 0 : i32
    %c0_i32_1 = arith.constant 0 : i32
    return %arg0, %c0_i32, %c0_i32_0 : i32, i32, i32
  }
}

</mosaic_0001>

<llo_original>
// kernel: tpu_custom_call.1
$region0: #{tpu_custom_call.1}
  #allocation0 [shape = 'u32[]', space=smem, size = 0x4, offset = 0x4, fixed_abs, tag = 'smem constant byte address 0x4 - core index']
  #allocation1 [shape = 'u32[144,128]{1,0:T(1,128)}', space=vmem, size = 0x12000, scoped, tag = 'internal scratch']
  %s0 = inlined_call_operand.hbm [shape: f32[2,1,8,8], index: 0, kind: input, shape index: {}]
  %s1 = inlined_call_operand.hbm [shape: f32[2,1,8,8], index: 1, kind: input, shape index: {}]
  %s2 = inlined_call_operand.hbm [shape: f32[8,256], index: 2, kind: input, shape index: {}]
  %s3 = inlined_call_operand.vmem [shape: bf16[2,4,256], index: 3, kind: input, shape index: {}]
  %s4 = inlined_call_operand.hbm [shape: f32[2,2,256], index: 4, kind: output, shape index: {}]
  %s5 = sld [smem:[#allocation0]]
  $region61: #{tpu_custom_call.1} parent=0
    _
  %s7 = ssub.s32 1, %s5
  %s8 = scalar_select 0, %s7, %s5
  $region1: #{tpu_custom_call.1} parent=0
    #allocation2 [shape = 'u8[8192]{0}', space=vmem, size = 0x2000, scoped, tag = 'input window, operand 0']
    #allocation3 [shape = 's32[2]{0}', space=sflag, size = 0x8, scoped, tag = 'scoped memory for tpu_custom_call.1']
    #allocation4 [shape = 's32[2]{0}', space=sflag, size = 0x8, scoped, tag = 'scoped memory for tpu_custom_call.1']
    #allocation5 [shape = 'u8[8192]{0}', space=vmem, size = 0x2000, scoped, tag = 'input window, operand 1']
    #allocation6 [shape = 's32[2]{0}', space=sflag, size = 0x8, scoped, tag = 'scoped memory for tpu_custom_call.1']
    #allocation7 [shape = 'u8[8192]{0}', space=vmem, size = 0x2000, scoped, tag = 'input window, operand 2, single buffered']
    #allocation8 [shape = 'u8[4096]{0}', space=vmem, size = 0x1000, scoped, tag = 'output window, operand 0']
    %9 = vsyncpa [#allocation3], 0
    %s10 = scalar_lea.sflag [#allocation3], 1
    %11 = vsyncpa %s10, 0
    %12 = vsyncpa [#allocation6], 0
    %s13 = scalar_lea.sflag [#allocation6], 1
    %14 = vsyncpa %s13, 0
    %15 = vsyncpa [#allocation4], 0
    %s16 = scalar_lea.sflag [#allocation4], 1
    %17 = vsyncpa %s16, 0
    loop: start=0, step=1, limit=4
    $region2: #{tpu_custom_call.1} parent=1 // loop_pre_header
      _
    $region3: #{tpu_custom_call.1} parent=1 // loop_header
      %s19 = sphi 0, %s23
      %p20 = scmp.ge.s32.totalorder %s19, 4
      %s29 = sphi 0, %s31
      %s32 = sphi 0, %s29
      %s33 = sphi 0, %s32
      %s49 = sphi 0, %s33
      %s55 = sphi 0, %s57
      %s58 = sphi 0, %s55
      %s59 = sphi 0, %s58
      %s75 = sphi 0, %s59
      %s79 = sphi 0, %s79
      %s81 = sphi 0, %s79
      %s82 = sphi 0, %s81
      %s96 = sphi 0, %s82
      %s102 = sphi 0, %s104
      %s105 = sphi 0, %s102
      %s106 = sphi 0, %s105
      %s122 = sphi 0, %s106
      %s128 = sphi 0, %s130
      %s131 = sphi 0, %s128
      %s132 = sphi 0, %s131
      %s148 = sphi 0, %s132
    $region4: #{tpu_custom_call.1} parent=1 // loop_header_branch
      %22 = sbr.rel (%p20) target = $region8
    $region5: #{tpu_custom_call.1} parent=1 // loop_body
      %s24 = ssub.s32 %s19, 1
      %s25 = ssub.s32 %s19, 2
      %s26 = sadd.s32 %s19, 1
      %s27 = ssub.s32 %s19, %s26
      %p28 = scmp.eq.s32.totalorder %s27, 0
      %s30 = sadd.s32 %s29, 1
      %s31 = scalar_select %p28, %s29, %s30
      %p34 = pneg %p28
      %p35 = scmp.eq.s32.totalorder %s19, 1
      %p36 = por %p34, %p35
      %p37 = scmp.ne.s32.totalorder %s29, %s32
      %p38 = scmp.eq.s32.totalorder %s19, 0
      %p39 = por %p37, %p38
      %p40 = scmp.ne.s32.totalorder %s29, %s32
      %p41 = scmp.eq.s32.totalorder %s24, 1
      %p42 = por %p40, %p41
      %p43 = scmp.ne.s32.totalorder %s32, %s33
      %p44 = scmp.eq.s32.totalorder %s24, 0
      %p45 = por %p43, %p44
      %p46 = scmp.ne.s32.totalorder %s32, %s33
      %p47 = scmp.eq.s32.totalorder %s25, 1
      %p48 = por %p46, %p47
      %p50 = scmp.ne.s32.totalorder %s33, %s49
      %p51 = scmp.eq.s32.totalorder %s25, 0
      %p52 = por %p50, %p51
      %s53 = ssub.s32 %s19, %s26
      %p54 = scmp.eq.s32.totalorder %s53, 0
      %s56 = sadd.s32 %s55, 1
      %s57 = scalar_select %p54, %s55, %s56
      %p60 = pneg %p54
      %p61 = scmp.eq.s32.totalorder %s19, 1
      %p62 = por %p60, %p61
      %p63 = scmp.ne.s32.totalorder %s55, %s58
      %p64 = scmp.eq.s32.totalorder %s19, 0
      %p65 = por %p63, %p64
      %p66 = scmp.ne.s32.totalorder %s55, %s58
      %p67 = scmp.eq.s32.totalorder %s24, 1
      %p68 = por %p66, %p67
      %p69 = scmp.ne.s32.totalorder %s58, %s59
      %p70 = scmp.eq.s32.totalorder %s24, 0
      %p71 = por %p69, %p70
      %p72 = scmp.ne.s32.totalorder %s58, %s59
      %p73 = scmp.eq.s32.totalorder %s25, 1
      %p74 = por %p72, %p73
      %p76 = scmp.ne.s32.totalorder %s59, %s75
      %p77 = scmp.eq.s32.totalorder %s25, 0
      %p78 = por %p76, %p77
      %s80 = sadd.s32 %s79, 1
      %p83 = scmp.eq.s32.totalorder %s19, 1
      %p84 = scmp.ne.s32.totalorder %s79, %s81
      %p85 = scmp.eq.s32.totalorder %s19, 0
      %p86 = por %p84, %p85
      %p87 = scmp.ne.s32.totalorder %s79, %s81
      %p88 = scmp.eq.s32.totalorder %s24, 1
      %p89 = por %p87, %p88
      %p90 = scmp.ne.s32.totalorder %s81, %s82
      %p91 = scmp.eq.s32.totalorder %s24, 0
      %p92 = por %p90, %p91
      %p93 = scmp.ne.s32.totalorder %s81, %s82
      %p94 = scmp.eq.s32.totalorder %s25, 1
      %p95 = por %p93, %p94
      %p97 = scmp.ne.s32.totalorder %s82, %s96
      %p98 = scmp.eq.s32.totalorder %s25, 0
      %p99 = por %p97, %p98
      %s100 = ssub.s32 %s19, %s26
      %p101 = scmp.eq.s32.totalorder %s100, 0
      %s103 = sadd.s32 %s102, 1
      %s104 = scalar_select %p101, %s102, %s103
      %p107 = pneg %p101
      %p108 = scmp.eq.s32.totalorder %s19, 1
      %p109 = por %p107, %p108
      %p110 = scmp.ne.s32.totalorder %s102, %s105
      %p111 = scmp.eq.s32.totalorder %s19, 0
      %p112 = por %p110, %p111
      %p113 = scmp.ne.s32.totalorder %s102, %s105
      %p114 = scmp.eq.s32.totalorder %s24, 1
      %p115 = por %p113, %p114
      %p116 = scmp.ne.s32.totalorder %s105, %s106
      %p117 = scmp.eq.s32.totalorder %s24, 0
      %p118 = por %p116, %p117
      %p119 = scmp.ne.s32.totalorder %s105, %s106
      %p120 = scmp.eq.s32.totalorder %s25, 1
      %p121 = por %p119, %p120
      %p123 = scmp.ne.s32.totalorder %s106, %s122
      %p124 = scmp.eq.s32.totalorder %s25, 0
      %p125 = por %p123, %p124
      %s126 = ssub.s32 %s19, %s26
      %p127 = scmp.eq.s32.totalorder %s126, 0
      %s129 = sadd.s32 %s128, 1
      %s130 = scalar_select %p127, %s128, %s129
      %p133 = pneg %p127
      %p134 = scmp.eq.s32.totalorder %s19, 1
      %p135 = por %p133, %p134
      %p136 = scmp.ne.s32.totalorder %s128, %s131
      %p137 = scmp.eq.s32.totalorder %s19, 0
      %p138 = por %p136, %p137
      %p139 = scmp.ne.s32.totalorder %s128, %s131
      %p140 = scmp.eq.s32.totalorder %s24, 1
      %p141 = por %p139, %p140
      %p142 = scmp.ne.s32.totalorder %s131, %s132
      %p143 = scmp.eq.s32.totalorder %s24, 0
      %p144 = por %p142, %p143
      %p145 = scmp.ne.s32.totalorder %s131, %s132
      %p146 = scmp.eq.s32.totalorder %s25, 1
      %p147 = por %p145, %p146
      %p149 = scmp.ne.s32.totalorder %s132, %s148
      %p150 = scmp.eq.s32.totalorder %s25, 0
      %p151 = por %p149, %p150
      %p152 = scmp.le.s32.totalorder 1, %s19
      %p153 = scmp.lt.s32.totalorder %s19, 3
      %p154 = pnand %p152, %p153
      %p155 = pneg %p154
      // Predicated region
      $region9: #{tpu_custom_call.1} parent=5 // pred_check
        _
      $region10: #{tpu_custom_call.1} parent=5 // pred_check_branch
        %157 = sbr.rel (%p154) target = $region12
      $region11: #{tpu_custom_call.1} parent=5 // pred_region
        %s158 = ssub.s32 %s19, 1
        // Predicated region
        $region13: #{tpu_custom_call.1} parent=11 // pred_check
          %p159 = pneg %p92
        $region14: #{tpu_custom_call.1} parent=11 // pred_check_branch
          %161 = sbr.rel (%p159) target = $region16
        $region15: #{tpu_custom_call.1} parent=11 // pred_region
          %s163 = ssub.s32 256, 256
          %164 = vsyncadd [#allocation6], %s163
          %s166 = sshll.u32 [#allocation7], 4
          %s167 = int_to_ptr.vmem [resolvable:$true] %s166
          %169 = dma.hbm_to_vmem [thread:$0]  %s2, 256, %s167, [#allocation6]
        $region16: #{tpu_custom_call.1} parent=11 // pred_fallthru
          _
      $region12: #{tpu_custom_call.1} parent=5 // pred_fallthru
        _
      %p170 = scmp.lt.s32.totalorder %s19, 2
      // Predicated region
      $region17: #{tpu_custom_call.1} parent=5 // pred_check
        %p171 = pneg %p170
      $region18: #{tpu_custom_call.1} parent=5 // pred_check_branch
        %173 = sbr.rel (%p171) target = $region20
      $region19: #{tpu_custom_call.1} parent=5 // pred_region
        // Predicated region
        $region21: #{tpu_custom_call.1} parent=19 // pred_check
          %p174 = pneg %p39
        $region22: #{tpu_custom_call.1} parent=19 // pred_check_branch
          %176 = sbr.rel (%p174) target = $region24
        $region23: #{tpu_custom_call.1} parent=19 // pred_region
          %s177 = sand.u32 %s29, 1
          %s178 = scalar_lea.sflag [#allocation3], %s177
          %s179 = sand.u32 %s29, 1
          %s180 = smul.addr %s179, 8
          %s181 = scalar_lea.vmem [#allocation2], %s180
          %s183 = ssub.s32 128, 128
          %184 = vsyncadd %s178, %s183
          %s185 = smul.addr %s19, 128
          %s186 = scalar_lea.hbm %s0, %s185
          %s188 = sshll.u32 %s181, 4
          %s189 = int_to_ptr.vmem [resolvable:$true] %s188
          %191 = dma.hbm_to_vmem [thread:$0]  %s186, 128, %s189, %s178
        $region24: #{tpu_custom_call.1} parent=19 // pred_fallthru
          _
        // Predicated region
        $region25: #{tpu_custom_call.1} parent=19 // pred_check
          %p192 = pneg %p65
        $region26: #{tpu_custom_call.1} parent=19 // pred_check_branch
          %194 = sbr.rel (%p192) target = $region28
        $region27: #{tpu_custom_call.1} parent=19 // pred_region
          %s195 = sand.u32 %s19, 1
          %s196 = scalar_lea.sflag [#allocation6], %s195
          %s197 = sand.u32 %s55, 1
          %s198 = smul.addr %s197, 8
          %s199 = scalar_lea.vmem [#allocation5], %s198
          %s201 = ssub.s32 128, 128
          %202 = vsyncadd %s196, %s201
          %s203 = smul.addr %s19, 128
          %s204 = scalar_lea.hbm %s1, %s203
          %s206 = sshll.u32 %s199, 4
          %s207 = int_to_ptr.vmem [resolvable:$true] %s206
          %209 = dma.hbm_to_vmem [thread:$0]  %s204, 128, %s207, %s196
        $region28: #{tpu_custom_call.1} parent=19 // pred_fallthru
          _
        // Predicated region
        $region29: #{tpu_custom_call.1} parent=19 // pred_check
          %p210 = pneg %p112
        $region30: #{tpu_custom_call.1} parent=19 // pred_check_branch
          %212 = sbr.rel (%p210) target = $region32
        $region31: #{tpu_custom_call.1} parent=19 // pred_region
          %p213 = scmp.lt.s32.totalorder %s19, 1
          %s214 = scalar_select %p213, %s19, 1
          %s215 = smul.addr %s214, 2
          %s216 = smul.addr %s215, 2
          %s217 = scalar_lea.vmem %s3, %s216
        $region32: #{tpu_custom_call.1} parent=19 // pred_fallthru
          _
      $region20: #{tpu_custom_call.1} parent=5 // pred_fallthru
        _
      %p218 = scmp.le.s32.totalorder 1, %s19
      %p219 = scmp.lt.s32.totalorder %s19, 3
      %p220 = pnand %p218, %p219
      %p221 = pneg %p220
      // Predicated region
      $region33: #{tpu_custom_call.1} parent=5 // pred_check
        _
      $region34: #{tpu_custom_call.1} parent=5 // pred_check_branch
        %223 = sbr.rel (%p220) target = $region36
      $region35: #{tpu_custom_call.1} parent=5 // pred_region
        %s224 = ssub.s32 %s19, 1
        %s225 = sand.u32 %s32, 1
        %s226 = scalar_lea.sflag [#allocation3], %s225
        %s227 = sand.u32 %s32, 1
        %s228 = smul.addr %s227, 8
        %s229 = scalar_lea.vmem [#allocation2], %s228
        // Predicated region
        $region37: #{tpu_custom_call.1} parent=35 // pred_check
          %p230 = pneg %p45
        $region38: #{tpu_custom_call.1} parent=35 // pred_check_branch
          %232 = sbr.rel (%p230) target = $region40
        $region39: #{tpu_custom_call.1} parent=35 // pred_region
          %233 = dma.done %s226, 128
        $region40: #{tpu_custom_call.1} parent=35 // pred_fallthru
          _
        %s234 = sand.u32 %s24, 1
        %s235 = scalar_lea.sflag [#allocation6], %s234
        %s236 = sand.u32 %s58, 1
        %s237 = smul.addr %s236, 8
        %s238 = scalar_lea.vmem [#allocation5], %s237
        // Predicated region
        $region41: #{tpu_custom_call.1} parent=35 // pred_check
          %p239 = pneg %p71
        $region42: #{tpu_custom_call.1} parent=35 // pred_check_branch
          %241 = sbr.rel (%p239) target = $region44
        $region43: #{tpu_custom_call.1} parent=35 // pred_region
          %242 = dma.done %s235, 128
        $region44: #{tpu_custom_call.1} parent=35 // pred_fallthru
          _
        // Predicated region
        $region45: #{tpu_custom_call.1} parent=35 // pred_check
          %p243 = pneg %p92
        $region46: #{tpu_custom_call.1} parent=35 // pred_check_branch
          %245 = sbr.rel (%p243) target = $region48
        $region47: #{tpu_custom_call.1} parent=35 // pred_region
          %246 = dma.done [#allocation6], 256
        $region48: #{tpu_custom_call.1} parent=35 // pred_fallthru
          _
        %s247 = sand.u32 %s32, 1
        %s248 = scalar_lea.sflag [#allocation3], %s247
        %s249 = sand.u32 %s32, 1
        %s250 = smul.addr %s249, 8
        %s251 = scalar_lea.vmem [#allocation2], %s250
        %p252 = pneg %p45
        %p253 = pneg %p42
        %s254 = sand.u32 %s24, 1
        %s255 = scalar_lea.sflag [#allocation6], %s254
        %s256 = sand.u32 %s58, 1
        %s257 = smul.addr %s256, 8
        %s258 = scalar_lea.vmem [#allocation5], %s257
        %p259 = pneg %p71
        %p260 = pneg %p68
        %p261 = pneg %p92
        %p262 = pneg %p89
        %p263 = scmp.lt.s32.totalorder %s24, 1
        %s264 = scalar_select %p263, %s24, 1
        %s265 = smul.addr %s264, 2
        %s266 = smul.addr %s265, 2
        %s267 = scalar_lea.vmem %s3, %s266
        %p268 = pneg %p118
        %p269 = pneg %p115
        %p270 = pneg %p144
        %p271 = pneg %p141
        %s272 = sand.u32 %s131, 1
        %s273 = scalar_lea.sflag [#allocation4], %s272
        %s274 = sand.u32 %s131, 1
        %s275 = smul.addr %s274, 4
        %s276 = scalar_lea.vmem [#allocation8], %s275
        %p277 = scmp.lt.s32.totalorder %s24, 1
        %s278 = scalar_select %p277, %s24, 1
        %s279 = smul.addr %s278, 2
        %s280 = smul.addr %s279, 2
        %s281 = scalar_lea.vmem %s3, %s280
        %v282 = vld [vmem:[#allocation7] sm:$0xff]
        %v283 = vld [vmem:[#allocation7 + $0x8] sm:$0xff]
        %v286 = vrot.slane %v282, 6
        %v287 = vrot.slane %v283, 6
        %v290 = vsub.f32 %v282, %v286
        %v291 = vsub.f32 %v283, %v287
        %v294 = vrot.slane %v290, 1
        %v295 = vrot.slane %v291, 1
        %v298 = vmul.f32 %v290, %v294
        %v299 = vmul.f32 %v291, %v295
        %v300 = vlaneseq
        %v301 = vand.u32 %v300, 127
        %v302 = vadd.s32 %v301, 128
        %v303 = vlaneseq
        %v304 = vshrl.u32 %v303, 7
        %v305 = vld [vmem:[%s229] sm:$0xff]
        %v306 = vld [vmem:[%s238] sm:$0xff]
        %308 = vset.pattern.permute.xlu0 2
        %309 = vperm.xlu0 %308, %v305
        %v310 = vpop.permute.xlu0 %309
        %v312 = vlaneseq
        %v313 = vshrl.u32 %v312, 7
        %v314 = vsub.s32 2, %v313
        %v315 = vrot.slane %v282, %v314
        %v316 = vlaneseq
        %v317 = vshrl.u32 %v316, 7
        %v318 = vsub.s32 2, %v317
        %v319 = vrot.slane %v283, %v318
        %v320 = vmin.f32 %v310, %v315
        %v321 = vmin.f32 %v310, %v319
        %322 = vset.pattern.permute.xlu0 0
        %323 = vperm.xlu0 %322, %v305
        %v324 = vpop.permute.xlu0 %323
        %v326 = vlaneseq
        %v327 = vshrl.u32 %v326, 7
        %v328 = vsub.s32 0, %v327
        %v329 = vrot.slane %v282, %v328
        %v330 = vlaneseq
        %v331 = vshrl.u32 %v330, 7
        %v332 = vsub.s32 0, %v331
        %v333 = vrot.slane %v283, %v332
        %v334 = vmax.f32 %v324, %v329
        %v335 = vmax.f32 %v324, %v333
        %v336 = vsub.f32 %v320, %v334
        %v337 = vsub.f32 %v321, %v335
        %v338 = vmax.f32 %v336, 0.0
        %v339 = vmax.f32 %v337, 0.0
        %340 = vset.pattern.permute.xlu0 3
        %341 = vperm.xlu0 %340, %v305
        %v342 = vpop.permute.xlu0 %341
        %v344 = vlaneseq
        %v345 = vshrl.u32 %v344, 7
        %v346 = vsub.s32 3, %v345
        %v347 = vrot.slane %v282, %v346
        %v348 = vlaneseq
        %v349 = vshrl.u32 %v348, 7
        %v350 = vsub.s32 3, %v349
        %v351 = vrot.slane %v283, %v350
        %v352 = vmin.f32 %v342, %v347
        %v353 = vmin.f32 %v342, %v351
        %354 = vset.pattern.permute.xlu0 1
        %355 = vperm.xlu0 %354, %v305
        %v356 = vpop.permute.xlu0 %355
        %v358 = vlaneseq
        %v359 = vshrl.u32 %v358, 7
        %v360 = vsub.s32 1, %v359
        %v361 = vrot.slane %v282, %v360
        %v362 = vlaneseq
        %v363 = vshrl.u32 %v362, 7
        %v364 = vsub.s32 1, %v363
        %v365 = vrot.slane %v283, %v364
        %v366 = vmax.f32 %v356, %v361
        %v367 = vmax.f32 %v356, %v365
        %v368 = vsub.f32 %v352, %v366
        %v369 = vsub.f32 %v353, %v367
        %v370 = vmax.f32 %v368, 0.0
        %v371 = vmax.f32 %v369, 0.0
        %v372 = vmul.f32 %v338, %v370
        %v373 = vmul.f32 %v339, %v371
        %374 = vrot.lane.b32.xlu0 %v305, 2
        %v375 = vpop.permute.xlu0 %374
        %v377 = vsub.f32 %v305, %v375
        %379 = vrot.lane.b32.xlu0 %v377, 127
        %v380 = vpop.permute.xlu0 %379
        %v382 = vmul.f32 %v377, %v380
        %384 = vset.pattern.permute.xlu0 2
        %385 = vperm.xlu0 %384, %v382
        %v386 = vpop.permute.xlu0 %385
        %v388 = vlaneseq
        %v389 = vshrl.u32 %v388, 7
        %v390 = vsub.s32 2, %v389
        %v391 = vrot.slane %v298, %v390
        %v392 = vlaneseq
        %v393 = vshrl.u32 %v392, 7
        %v394 = vsub.s32 2, %v393
        %v395 = vrot.slane %v299, %v394
        %v396 = vadd.f32 %v386, %v391
        %v397 = vadd.f32 %v386, %v395
        %v398 = vsub.f32 %v396, %v372
        %v399 = vsub.f32 %v397, %v373
        %v400 = vrcp.pop %v398
        %v401 = vrcp.pop %v399
        %v402 = vmul.f32 %v372, %v400
        %v403 = vmul.f32 %v373, %v401
        %vm404 = vcmp.gt.f32.partialorder %v305, 0.0
        %v405 = vsel %vm404, 1, 0
        %406 = vset.pattern.permute.xlu0 5
        %407 = vperm.xlu0 %406, %v405
        %v408 = vpop.permute.xlu0 %407
        %vm409 = vcmp.eq.s32.totalorder %v408, 1
        %v410 = vsel %vm409, %v402, -1.0
        %v411 = vsel %vm409, %v403, -1.0
        %v412 = vmax.f32 %v410, %v411
        %413 = vmax.xlane.f32.xlu0 %v412
        %v414 = vpop.xlane.xlu0 %413
        %vm415 = vcmp.eq.f32.partialorder %v410, %v414
        %vm416 = vcmp.eq.f32.partialorder %v411, %v414
        %v417 = vsel %vm415, %v301, 256
        %v418 = vsel %vm416, %v302, 256
        %vm419 = vcmp.lt.s32.totalorder %v417, %v418
        %v420 = vsel %vm419, %v417, %v418
        %v421 = vand.u32 %v420, 65535
        %v422 = vshra.s32 %v420, 16
        %v423 = vcvt.s32.f32 %v421
        %v424 = vcvt.s32.f32 %v422
        %425 = vmin.xlane.f32.xlu0 %v424
        %v426 = vpop.xlane.xlu0 %425
        %vm427 = vcmp.eq.f32.partialorder %v424, %v426
        %v428 = vsel %vm427, %v423, inf
        %429 = vmin.xlane.f32.xlu0 %v428
        %v430 = vpop.xlane.xlu0 %429
        %v431 = vcvt.f32.s32 %v430
        %v432 = vcvt.f32.s32 %v426
        %v433 = vshll.u32 %v432, 16
        %v434 = vadd.s32 %v433, %v431
        %vm435 = vcmp.eq.s32.totalorder %v434, %v301
        %vm436 = vcmp.eq.s32.totalorder %v434, %v302
        %vm437 = vmand %vm435, %vm409
        %vm438 = vmand %vm436, %vm409
        %v439 = vcvt.s32.f32 %v304
        %v440 = vadd.f32 %v439, 2.0
        %v441 = vsel %vm437, %v440, %v410
        %v442 = vsel %vm438, %v440, %v411
        %v443 = vrot.slane %v441, 4
        %v444 = vmax.f32 %v441, %v443
        %v445 = vrot.slane %v444, 2
        %v446 = vmax.f32 %v444, %v445
        %v447 = vrot.slane %v446, 1
        %v448 = vmax.f32 %v446, %v447
        %v449 = vrot.slane %v442, 4
        %v450 = vmax.f32 %v442, %v449
        %v451 = vrot.slane %v450, 2
        %v452 = vmax.f32 %v450, %v451
        %v453 = vrot.slane %v452, 1
        %v454 = vmax.f32 %v452, %v453
        %vm455 = vcmp.eq.f32.partialorder %v441, %v448
        %vm456 = vcmp.eq.f32.partialorder %v442, %v454
        %v457 = vsel %vm455, %v304, 8
        %v458 = vsel %vm456, %v304, 8
        %v459 = vrot.slane %v457, 4
        %vm460 = vcmp.lt.s32.totalorder %v457, %v459
        %v461 = vsel %vm460, %v457, %v459
        %v462 = vrot.slane %v461, 2
        %vm463 = vcmp.lt.s32.totalorder %v461, %v462
        %v464 = vsel %vm463, %v461, %v462
        %v465 = vrot.slane %v464, 1
        %vm466 = vcmp.lt.s32.totalorder %v464, %v465
        %v467 = vsel %vm466, %v464, %v465
        %v468 = vrot.slane %v458, 4
        %vm469 = vcmp.lt.s32.totalorder %v458, %v468
        %v470 = vsel %vm469, %v458, %v468
        %v471 = vrot.slane %v470, 2
        %vm472 = vcmp.lt.s32.totalorder %v470, %v471
        %v473 = vsel %vm472, %v470, %v471
        %v474 = vrot.slane %v473, 1
        %vm475 = vcmp.lt.s32.totalorder %v473, %v474
        %v476 = vsel %vm475, %v473, %v474
        %vm477 = vcmp.eq.s32.totalorder %v467, %v304
        %vm478 = vcmp.eq.s32.totalorder %v476, %v304
        %v479 = vsel %vm477, 1, 0
        %v480 = vsel %vm478, 1, 0
        %v481 = vcvt.s32.f32 %v479
        %v482 = vcvt.s32.f32 %v480
        %vm483 = vcmask 64512
        %v485 = vsel %vm483, %v306, 0
        %487 = vmatprep.subr.mxu0 %v482
        %488 = vmatpush1.msra.mxu0 %v481
        %489 = vmatprep.subr.mxu0 0.0
        %490 = vmatpush1.msra.mxu0 0.0
        %491 = vmatprep.subr.mxu0 0.0
        %492 = vmatpush1.msra.mxu0 0.0
        %493 = vmatprep.subr.mxu0 0.0
        %494 = vmatpush1.msra.mxu0 0.0
        %495 = vmatprep.subr.mxu0 0.0
        %496 = vmatpush1.msra.mxu0 0.0
        %497 = vmatprep.subr.mxu0 0.0
        %498 = vmatpush1.msra.mxu0 0.0
        %499 = vmatprep.subr.mxu0 0.0
        %500 = vmatpush1.msra.mxu0 0.0
        %501 = vmatprep.subr.mxu0 0.0
        %502 = vmatpush1.msra.mxu0 0.0
        %503 = vmatprep.subr.mxu0 0.0
        %504 = vmatpush1.msra.mxu0 0.0
        %505 = vmatprep.subr.mxu0 0.0
        %506 = vmatpush1.msra.mxu0 0.0
        %507 = vmatprep.subr.mxu0 0.0
        %508 = vmatpush1.msra.mxu0 0.0
        %509 = vmatprep.subr.mxu0 0.0
        %510 = vmatpush1.msra.mxu0 0.0
        %511 = vmatprep.subr.mxu0 0.0
        %512 = vmatpush1.msra.mxu0 0.0
        %513 = vmatprep.subr.mxu0 0.0
        %514 = vmatpush1.msra.mxu0 0.0
        %515 = vmatprep.subr.mxu0 0.0
        %516 = vmatpush1.msra.mxu0 0.0
        %517 = vmatprep.subr.mxu0 0.0
        %518 = vmatpush1.msra.mxu0 0.0
        %519 = vmatprep.subr.mxu0 0.0
        %520 = vmatpush1.msra.mxu0 0.0
        %521 = vmatprep.subr.mxu0 0.0
        %522 = vmatpush1.msra.mxu0 0.0
        %523 = vmatprep.subr.mxu0 0.0
        %524 = vmatpush1.msra.mxu0 0.0
        %525 = vmatprep.subr.mxu0 0.0
        %526 = vmatpush1.msra.mxu0 0.0
        %527 = vmatprep.subr.mxu0 0.0
        %528 = vmatpush1.msra.mxu0 0.0
        %529 = vmatprep.subr.mxu0 0.0
        %530 = vmatpush1.msra.mxu0 0.0
        %531 = vmatprep.subr.mxu0 0.0
        %532 = vmatpush1.msra.mxu0 0.0
        %533 = vmatprep.subr.mxu0 0.0
        %534 = vmatpush1.msra.mxu0 0.0
        %535 = vmatprep.subr.mxu0 0.0
        %536 = vmatpush1.msra.mxu0 0.0
        %537 = vmatprep.subr.mxu0 0.0
        %538 = vmatpush1.msra.mxu0 0.0
        %539 = vmatprep.subr.mxu0 0.0
        %540 = vmatpush1.msra.mxu0 0.0
        %541 = vmatprep.subr.mxu0 0.0
        %542 = vmatpush1.msra.mxu0 0.0
        %543 = vmatprep.subr.mxu0 0.0
        %544 = vmatpush1.msra.mxu0 0.0
        %545 = vmatprep.subr.mxu0 0.0
        %546 = vmatpush1.msra.mxu0 0.0
        %547 = vmatprep.subr.mxu0 0.0
        %548 = vmatpush1.msra.mxu0 0.0
        %549 = vmatprep.subr.mxu0 0.0
        %550 = vmatpush1.msra.mxu0 0.0
        %551 = vmatprep.mubr.f32.mxu0 0.0
        %552 = vmatmul.mubr.f32.gmra.mrb[0].mxu0 %v485
        %v553 = vpop.f32.mrb[0].mxu0
        %v554 = vadd.f32 0.0, %v553
        %v555 = vpop.f32.mrb[0].mxu0
        %v556 = vadd.f32 0.0, %v555
        %557 = vdwg.mxu0
        %vm558 = vcmp.gt.f32.partialorder %v448, -inf
        %vm559 = vcmp.gt.f32.partialorder %v454, -inf
        %v560 = vsel %vm558, %v448, -inf
        %v561 = vsel %vm559, %v454, -inf
        %v562 = vsel %vm558, 1, 0
        %v563 = vsel %vm559, 1, 0
        %vm564 = vcmp.eq.s32.totalorder %v562, 1
        %vm565 = vcmp.eq.s32.totalorder %v563, 1
        %v566 = vsel %vm564, %v554, 0.0
        %v567 = vsel %vm565, %v556, 0.0
        %v568 = vmin.f32 %v566, %v282
        %v569 = vmin.f32 %v567, %v283
        %v570 = vmax.f32 %v566, %v282
        %v571 = vmax.f32 %v567, %v283
        %v574 = vrot.slane %v570, 6
        %v575 = vrot.slane %v571, 6
        %v578 = vsub.f32 %v568, %v574
        %v579 = vsub.f32 %v569, %v575
        %v580 = vmax.f32 %v578, 0.0
        %v581 = vmax.f32 %v579, 0.0
        %v584 = vrot.slane %v580, 1
        %v585 = vrot.slane %v581, 1
        %v588 = vmul.f32 %v580, %v584
        %v589 = vmul.f32 %v581, %v585
        %v592 = vrot.slane %v566, 6
        %v593 = vrot.slane %v567, 6
        %v596 = vsub.f32 %v566, %v592
        %v597 = vsub.f32 %v567, %v593
        %v600 = vrot.slane %v596, 1
        %v601 = vrot.slane %v597, 1
        %v604 = vmul.f32 %v596, %v600
        %v605 = vmul.f32 %v597, %v601
        %v606 = vadd.f32 %v604, %v298
        %v607 = vadd.f32 %v605, %v299
        %v608 = vsub.f32 %v606, %v588
        %v609 = vsub.f32 %v607, %v589
        %vm610 = vcmp.ge.f32.partialorder %v560, 2.0
        %vm611 = vcmp.ge.f32.partialorder %v561, 2.0
        %v612 = vmul.f32 %v608, 0.5
        %v613 = vmul.f32 %v609, 0.5
        %vm614 = vcmp.ge.f32.partialorder %v588, %v612
        %vm615 = vcmp.ge.f32.partialorder %v589, %v613
        %vm616 = vmor %vm610, %vm614
        %vm617 = vmor %vm611, %vm615
        %v618 = vrot.slane %v566, 2
        %v619 = vrot.slane %v567, 2
        %v622 = vsel %vm616, %v618, 0.0
        %v623 = vsel %vm617, %v619, 0.0
        %vm624 = vcmp.ne.f32.partialorder %v622, 0.0
        %vm625 = vcmp.ne.f32.partialorder %v623, 0.0
        %v626 = vadd.f32 %v566, %v618
        %v627 = vadd.f32 %v567, %v619
        %v628 = vmul.f32 %v626, 0.5
        %v629 = vmul.f32 %v627, 0.5
        %v630 = vrot.slane %v282, 4
        %v631 = vrot.slane %v283, 4
        %v634 = vsub.f32 %v628, %v630
        %v635 = vsub.f32 %v629, %v631
        %v636 = vmul.f32 %v282, 10.0
        %v637 = vmul.f32 %v283, 10.0
        %v640 = vrot.slane %v636, 6
        %v641 = vrot.slane %v637, 6
        %v644 = vmul.f32 %v634, %v640
        %v645 = vmul.f32 %v635, %v641
        %v646 = vmul.f32 %v596, %v630
        %v647 = vmul.f32 %v597, %v631
        %v648 = vlog2.pop %v646
        %v649 = vmul.f32 %v648, 0.6931472
        %v650 = vlog2.pop %v647
        %v651 = vmul.f32 %v650, 0.6931472
        %v652 = vmul.f32 %v649, 5.0
        %v653 = vmul.f32 %v651, 5.0
        %v654 = vld [vmem:[%s281] sm:$0xf]
        %v655 = vunpack.c.l.bf16 %v654
        %v658 = vcombine.low %v644, %v645
        %v660 = vsub.f32 %v655, %v658
        %v661 = vand.u32 2147483647, %v660
        %v663 = vrot.slane %v661, 5
        %v664 = vrot.slane %v663, 4
        %v666 = vadd.f32 %v661, %v664
        %v669 = vcombine.low %v652, %v653
        %v671 = vsub.f32 %v655, %v669
        %v672 = vand.u32 2147483647, %v671
        %v674 = vrot.slane %v672, 6
        %v675 = vrot.slane %v674, 4
        %v677 = vadd.f32 %v666, %v675
        %v678 = vrot.slane %v672, 7
        %v679 = vrot.slane %v678, 4
        %v681 = vadd.f32 %v677, %v679
        %v683 = vlaneseq
        %v684 = vshrl.u32 %v683, 7
        %v685 = vsub.s32 0, %v684
        %v686 = vrot.slane %v681, %v685
        %v687 = vlaneseq
        %v688 = vshrl.u32 %v687, 7
        %v689 = vsub.s32 4, %v688
        %v690 = vrot.slane %v681, %v689
        %v693 = vsel %vm624, %v686, 0.0
        %v694 = vsel %vm625, %v690, 0.0
        %v697 = vcombine.low %v622, %v623
        %v699 = vunpack.c.l.s4 1966171168
        %v700 = vunpack.c.0.s8 %v699
        %v701 = vlaneseq
        %v702 = vshrl.u32 %v701, 7
        %v703 = vsub.s32 %v700, %v702
        %v704 = vrot.slane %v697, %v703
        %v706 = vunpack.c.l.s4 1966171168
        %v707 = vunpack.c.0.s8 %v706
        %v708 = vlaneseq
        %v709 = vshrl.u32 %v708, 7
        %v710 = vsub.s32 %v707, %v709
        %v711 = vrot.slane %v704, %v710
        %v712 = vcombine.high %v711, %v711
        %v714 = vlaneseq
        %vm715 = vcmp.ge.s32.totalorder %v714, 0
        %vm716 = vcmp.lt.s32.totalorder %v714, 256
        %vm717 = vmand %vm715, %vm716
        %718 = vst.msk [vmem:[%s276] ss:$2 sm:$0x3] %vm717, %v712
        %v721 = vcombine.low %v693, %v694
        %v723 = vunpack.c.l.s4 1966171168
        %v724 = vunpack.c.0.s8 %v723
        %v725 = vlaneseq
        %v726 = vshrl.u32 %v725, 7
        %v727 = vsub.s32 %v724, %v726
        %v728 = vrot.slane %v721, %v727
        %v730 = vunpack.c.l.s4 1966171168
        %v731 = vunpack.c.0.s8 %v730
        %v732 = vlaneseq
        %v733 = vshrl.u32 %v732, 7
        %v734 = vsub.s32 %v731, %v733
        %v735 = vrot.slane %v728, %v734
        %v736 = vcombine.high %v735, %v735
        %s738 = scalar_lea.vmem %s276, 1 [#allocation8]
        %739 = vst.msk [vmem:[%s738] ss:$2 sm:$0x3] %vm717, %v736
        %s740 = sand.u32 %s131, 1
        %s741 = scalar_lea.sflag [#allocation4], %s740
        %s742 = sand.u32 %s131, 1
        %s743 = smul.addr %s742, 4
        %s744 = scalar_lea.vmem [#allocation8], %s743
        // Predicated region
        $region49: #{tpu_custom_call.1} parent=35 // pred_check
          %p745 = pneg %p141
        $region50: #{tpu_custom_call.1} parent=35 // pred_check_branch
          %747 = sbr.rel (%p745) target = $region52
        $region51: #{tpu_custom_call.1} parent=35 // pred_region
          %s749 = ssub.s32 64, 64
          %750 = vsyncadd %s741, %s749
          %s751 = smul.addr %s24, 2
          %s752 = smul.addr %s751, 32
          %s753 = scalar_lea.hbm %s4, %s752
          %s755 = sshll.u32 %s744, 4
          %s756 = int_to_ptr.vmem [resolvable:$true] %s755
          %758 = dma.vmem_to_hbm [thread:$0]  %s756, 64, %s753, %s741
        $region52: #{tpu_custom_call.1} parent=35 // pred_fallthru
          _
      $region36: #{tpu_custom_call.1} parent=5 // pred_fallthru
        _
      %p759 = scmp.le.s32.totalorder 2, %s19
      // Predicated region
      $region53: #{tpu_custom_call.1} parent=5 // pred_check
        %p760 = pneg %p759
      $region54: #{tpu_custom_call.1} parent=5 // pred_check_branch
        %762 = sbr.rel (%p760) target = $region56
      $region55: #{tpu_custom_call.1} parent=5 // pred_region
        %s763 = ssub.s32 %s19, 2
        // Predicated region
        $region57: #{tpu_custom_call.1} parent=55 // pred_check
          %p764 = pneg %p147
        $region58: #{tpu_custom_call.1} parent=55 // pred_check_branch
          %766 = sbr.rel (%p764) target = $region60
        $region59: #{tpu_custom_call.1} parent=55 // pred_region
          %s767 = sand.u32 %s132, 1
          %s768 = scalar_lea.sflag [#allocation4], %s767
          %s769 = sand.u32 %s132, 1
          %s770 = smul.addr %s769, 4
          %s771 = scalar_lea.vmem [#allocation8], %s770
          %772 = dma.done %s768, 64
        $region60: #{tpu_custom_call.1} parent=55 // pred_fallthru
          _
      $region56: #{tpu_custom_call.1} parent=5 // pred_fallthru
        _
    $region6: #{tpu_custom_call.1} parent=1 // loop_footer
      %s23 = sadd.s32 1, %s19
    $region7: #{tpu_custom_call.1} parent=1 // loop_footer_branch
      %18 = sbr.rel target = $region3
    $region8: #{tpu_custom_call.1} parent=1 // loop_exit
      _
    %773 = vsyncpa [#allocation3], 1
    %s774 = scalar_lea.sflag [#allocation3], 1
    %775 = vsyncpa %s774, 1
    %776 = vsyncpa [#allocation6], 1
    %s777 = scalar_lea.sflag [#allocation6], 1
    %778 = vsyncpa %s777, 1
    %779 = vsyncpa [#allocation4], 1
    %s780 = scalar_lea.sflag [#allocation4], 1
    %781 = vsyncpa %s780, 1

</llo_original>
